<compile_context>
chip_gen: v5e
topology: v5e:2x2
jax: 0.10.0
libtpu: 0.0.40
codegen_flags: <defaults>
</compile_context>

<pallas_src>
import jax
import jax.numpy as jnp
from jax import lax
from jax.experimental import pallas as pl
from jax.experimental.pallas import tpu as pltpu


_SQRT_2_OVER_PI = 0.7978845608028654


def _gelu_tanh(x):
    # GELU(approximate='tanh'): 0.5*x*(1+tanh(sqrt(2/pi)*(x+0.044715*x^3)))
    return 0.5 * x * (1.0 + jnp.tanh(_SQRT_2_OVER_PI * (x + 0.044715 * x * x * x)))


def mlp_kernel(x_ref, w1_ref, b1_ref, w2_ref, b2_ref, o_ref, acc_ref):
    # x_ref:  (tm, C)   activation row tile (resident across the h axis)
    # w1_ref: (th, C)   c_fc weight slice   (PyTorch (out, in) layout)
    # b1_ref: (1, th)   c_fc bias slice
    # w2_ref: (C, th)   c_proj weight slice (PyTorch (out, in) layout)
    # b2_ref: (1, C)    c_proj bias (resident)
    # o_ref:  (tm, C)   output tile (same block across h -> accumulator output)
    # acc_ref:(tm, C)   f32 accumulator scratch
    h_idx = pl.program_id(1)

    @pl.when(h_idx == 0)
    def _():
        acc_ref[...] = jnp.zeros_like(acc_ref)

    x = x_ref[...]
    # hidden = x @ w1_slice.T  (contract C with C; f32 MXU accumulation)
    hidden = lax.dot_general(
        x, w1_ref[...],
        dimension_numbers=(((1,), (1,)), ((), ())),
        preferred_element_type=jnp.float32,
    )
    hidden = hidden + b1_ref[...].astype(jnp.float32)
    g = _gelu_tanh(hidden)  # f32 elementwise (VPU/EUP), tiles cleanly over H

    # acc += g @ w2_slice.T  (contract th with th)
    acc_ref[...] += lax.dot_general(
        g.astype(w2_ref.dtype), w2_ref[...],
        dimension_numbers=(((1,), (1,)), ((), ())),
        preferred_element_type=jnp.float32,
    )

    @pl.when(h_idx == pl.num_programs(1) - 1)
    def _():
        o_ref[...] = (acc_ref[...] + b2_ref[...].astype(jnp.float32)).astype(o_ref.dtype)


def _pick_tm(M, requested=None):
    if requested is not None:
        return requested
    if M <= 512:
        return M          # single/full block: always layout-legal
    return 512            # multiple of 8 (f32) and 16 (bf16) sublanes


def _pick_th(H, requested=None):
    if requested is not None:
        return requested
    if H <= 2048:
        return H          # weights fully VMEM-resident, single reduction step
    # H is a contraction dim for the second matmul, so th must divide H exactly
    # (a padded partial block would corrupt the accumulation).
    for cand in range(2048, 127, -128):
        if H % cand == 0:
            return cand
    return H


def mlp_pallas(x, w1, b1, w2, b2, *, tm=None, th=None):
    """GPT-2 MLP forward: c_proj(GELU_tanh(c_fc(x))).

    x:  (B, T, C)
    w1: (H, C)  c_fc.weight   (PyTorch (out_features, in_features), H = 4*C)
    b1: (H,)    c_fc.bias
    w2: (C, H)  c_proj.weight
    b2: (C,)    c_proj.bias
    """
    B, T, C = x.shape
    H, C_in = w1.shape
    assert C_in == C and w2.shape == (C, H) and b1.shape == (H,) and b2.shape == (C,)
    M = B * T

    tm = _pick_tm(M, tm)
    th = _pick_th(H, th)
    num_m = pl.cdiv(M, tm)
    num_h = pl.cdiv(H, th)

    x2 = x.reshape(M, C)
    b1r = b1.reshape(1, H)
    b2r = b2.reshape(1, C)

    out2 = pl.pallas_call(
        mlp_kernel,
        out_shape=jax.ShapeDtypeStruct((M, C), x.dtype),
        grid_spec=pltpu.PrefetchScalarGridSpec(
            num_scalar_prefetch=0,
            grid=(num_m, num_h),
            in_specs=[
                pl.BlockSpec((tm, C), lambda i, h: (i, 0)),   # x tile
                pl.BlockSpec((th, C), lambda i, h: (h, 0)),   # c_fc weight slice
                pl.BlockSpec((1, th), lambda i, h: (0, h)),   # c_fc bias slice
                pl.BlockSpec((C, th), lambda i, h: (0, h)),   # c_proj weight slice
                pl.BlockSpec((1, C), lambda i, h: (0, 0)),    # c_proj bias (resident)
            ],
            out_specs=pl.BlockSpec((tm, C), lambda i, h: (i, 0)),
            scratch_shapes=[pltpu.VMEM((tm, C), jnp.float32)],
        ),
        compiler_params=pltpu.CompilerParams(
            dimension_semantics=("parallel", "arbitrary"),
            vmem_limit_bytes=48 * 1024 * 1024,
        ),
    )(x2, w1, b1r, w2, b2r)

    return out2.reshape(B, T, C)


def mlp_reference(x, w1, b1, w2, b2):
    h = jnp.einsum("btc,hc->bth", x, w1) + b1
    g = _gelu_tanh(h)
    return jnp.einsum("bth,ch->btc", g, w2) + b2


if __name__ == "__main__":
    key = jax.random.PRNGKey(0)

    # --- small GPT-2-like config (grid collapses to a single step) ---
    B, T, C = 2, 8, 32
    H = 4 * C
    kx, kw1, kb1, kw2, kb2, k_big = jax.random.split(key, 6)

    x = jax.random.normal(kx, (B, T, C), dtype=jnp.float32)
    # PyTorch nn.Linear weight shape is (out_features, in_features).
    w1 = jax.random.normal(kw1, (H, C), dtype=jnp.float32) * 0.02
    b1 = jax.random.normal(kb1, (H,), dtype=jnp.float32) * 0.02
    w2 = jax.random.normal(kw2, (C, H), dtype=jnp.float32) * 0.02
    b2 = jax.random.normal(kb2, (C,), dtype=jnp.float32) * 0.02

    out = mlp_pallas(x, w1, b1, w2, b2)
    jax.block_until_ready(out)
    ref = mlp_reference(x, w1, b1, w2, b2)
    assert out.shape == (B, T, C)
    assert jnp.allclose(out, ref, atol=1e-4, rtol=1e-4), "mismatch vs reference (small)"

    # --- modest config forcing the M-tiled + H-accumulator path ---
    B2, T2, C2 = 2, 256, 128
    H2 = 4 * C2
    kx2, kw1b, kb1b, kw2b, kb2b = jax.random.split(k_big, 5)
    x_b = jax.random.normal(kx2, (B2, T2, C2), dtype=jnp.float32)
    w1_b = jax.random.normal(kw1b, (H2, C2), dtype=jnp.float32) * 0.02
    b1_b = jax.random.normal(kb1b, (H2,), dtype=jnp.float32) * 0.02
    w2_b = jax.random.normal(kw2b, (C2, H2), dtype=jnp.float32) * 0.02
    b2_b = jax.random.normal(kb2b, (C2,), dtype=jnp.float32) * 0.02

    out_b = mlp_pallas(x_b, w1_b, b1_b, w2_b, b2_b, tm=128, th=256)  # grid (4, 2)
    jax.block_until_ready(out_b)
    ref_b = mlp_reference(x_b, w1_b, b1_b, w2_b, b2_b)
    assert jnp.allclose(out_b, ref_b, atol=1e-4, rtol=1e-4), "mismatch vs reference (tiled)"

    print("KERNEL_OK")
</pallas_src>

<mosaic_0001>
module attributes {stable_mosaic.version = 11 : i64} {
  func.func @mlp_kernel(%arg0: i32, %arg1: i32, %arg2: memref<16x32xf32, #tpu.memory_space<vmem>>, %arg3: memref<128x32xf32, #tpu.memory_space<vmem>>, %arg4: memref<1x128xf32, #tpu.memory_space<vmem>>, %arg5: memref<32x128xf32, #tpu.memory_space<vmem>>, %arg6: memref<1x32xf32, #tpu.memory_space<vmem>>, %arg7: memref<16x32xf32, #tpu.memory_space<vmem>>, %arg8: memref<16x32xf32, #tpu.memory_space<vmem>>) attributes {dimension_semantics = [#tpu.dimension_semantics<parallel>, #tpu.dimension_semantics<arbitrary>], iteration_bounds = array<i64: 1, 1>, scalar_prefetch = 0 : i64, scratch_operands = 1 : i64, tpu.core_type = #tpu.core_type<tc>, window_params = [{transform_indices = @transform_0, window_bounds = array<i64: 16, 32>}, {transform_indices = @transform_1, window_bounds = array<i64: 128, 32>}, {transform_indices = @transform_2, window_bounds = array<i64: 1, 128>}, {transform_indices = @transform_3, window_bounds = array<i64: 32, 128>}, {pipeline_mode = #tpu.pipeline_mode<synchronous>, transform_indices = @transform_4, window_bounds = array<i64: 1, 32>}, {transform_indices = @transform_5, window_bounds = array<i64: 16, 32>}]} {
    %c0_i32 = arith.constant 0 : i32
    %0 = arith.cmpi eq, %arg1, %c0_i32 : i32
    %1 = arith.extui %0 : i1 to i32
    %c0_i32_0 = arith.constant 0 : i32
    %2 = arith.cmpi ne, %1, %c0_i32_0 : i32
    scf.if %2 {
      %cst_19 = arith.constant 0.000000e+00 : f32
      %30 = vector.broadcast %cst_19 : f32 to vector<16x32xf32>
      %c0_20 = arith.constant 0 : index
      %c0_21 = arith.constant 0 : index
      %31 = vector.load %arg8[%c0_20, %c0_21] : memref<16x32xf32, #tpu.memory_space<vmem>>, vector<16x32xf32>
      tpu.vector_store %arg8[%c0_20, %c0_21], %30 {strides = array<i32>} : memref<16x32xf32, #tpu.memory_space<vmem>>, vector<16x32xf32>,
    } else {
    }
    %c0 = arith.constant 0 : index
    %c0_1 = arith.constant 0 : index
    %3 = vector.load %arg2[%c0, %c0_1] : memref<16x32xf32, #tpu.memory_space<vmem>>, vector<16x32xf32>
    %c0_2 = arith.constant 0 : index
    %c0_3 = arith.constant 0 : index
    %4 = vector.load %arg3[%c0_2, %c0_3] : memref<128x32xf32, #tpu.memory_space<vmem>>, vector<128x32xf32>
    %cst = arith.constant dense<0.000000e+00> : vector<16x128xf32>
    %5 = tpu.matmul %3, %4, %cst {dimension_numbers = #tpu.dot_dimension_numbers<[1], [1], [0], [0], [0, 0, 1, 0], [], []>} : vector<16x32xf32>, vector<128x32xf32>, vector<16x128xf32> -> vector<16x128xf32>
    %c0_4 = arith.constant 0 : index
    %c0_5 = arith.constant 0 : index
    %6 = vector.load %arg4[%c0_4, %c0_5] : memref<1x128xf32, #tpu.memory_space<vmem>>, vector<1x128xf32>
    %7 = vector.broadcast %6 : vector<1x128xf32> to vector<16x128xf32>
    %8 = arith.addf %5, %7 : vector<16x128xf32>
    %cst_6 = arith.constant 5.000000e-01 : f32
    %9 = vector.broadcast %cst_6 : f32 to vector<16x128xf32>
    %10 = arith.mulf %9, %8 : vector<16x128xf32>
    %cst_7 = arith.constant 4.471500e-02 : f32
    %11 = vector.broadcast %cst_7 : f32 to vector<16x128xf32>
    %12 = arith.mulf %11, %8 : vector<16x128xf32>
    %13 = arith.mulf %12, %8 : vector<16x128xf32>
    %14 = arith.mulf %13, %8 : vector<16x128xf32>
    %15 = arith.addf %8, %14 : vector<16x128xf32>
    %cst_8 = arith.constant 0.797884583 : f32
    %16 = vector.broadcast %cst_8 : f32 to vector<16x128xf32>
    %17 = arith.mulf %16, %15 : vector<16x128xf32>
    %18 = math.tanh %17 : vector<16x128xf32>
    %cst_9 = arith.constant 1.000000e+00 : f32
    %19 = vector.broadcast %cst_9 : f32 to vector<16x128xf32>
    %20 = arith.addf %19, %18 : vector<16x128xf32>
    %21 = arith.mulf %10, %20 : vector<16x128xf32>
    %c0_10 = arith.constant 0 : index
    %c0_11 = arith.constant 0 : index
    %22 = vector.load %arg8[%c0_10, %c0_11] : memref<16x32xf32, #tpu.memory_space<vmem>>, vector<16x32xf32>
    %c0_12 = arith.constant 0 : index
    %c0_13 = arith.constant 0 : index
    %23 = vector.load %arg5[%c0_12, %c0_13] : memref<32x128xf32, #tpu.memory_space<vmem>>, vector<32x128xf32>
    %cst_14 = arith.constant dense<0.000000e+00> : vector<16x32xf32>
    %24 = tpu.matmul %21, %23, %cst_14 {dimension_numbers = #tpu.dot_dimension_numbers<[1], [1], [0], [0], [0, 0, 1, 0], [], []>} : vector<16x128xf32>, vector<32x128xf32>, vector<16x32xf32> -> vector<16x32xf32>
    %25 = arith.addf %22, %24 : vector<16x32xf32>
    %c0_15 = arith.constant 0 : index
    %c0_16 = arith.constant 0 : index
    %26 = vector.load %arg8[%c0_15, %c0_16] : memref<16x32xf32, #tpu.memory_space<vmem>>, vector<16x32xf32>
    tpu.vector_store %arg8[%c0_15, %c0_16], %25 {strides = array<i32>} : memref<16x32xf32, #tpu.memory_space<vmem>>, vector<16x32xf32>,
    %c0_i32_17 = arith.constant 0 : i32
    %27 = arith.cmpi eq, %arg1, %c0_i32_17 : i32
    %28 = arith.extui %27 : i1 to i32
    %c0_i32_18 = arith.constant 0 : i32
    %29 = arith.cmpi ne, %28, %c0_i32_18 : i32
    scf.if %29 {
      %c0_19 = arith.constant 0 : index
      %c0_20 = arith.constant 0 : index
      %30 = vector.load %arg8[%c0_19, %c0_20] : memref<16x32xf32, #tpu.memory_space<vmem>>, vector<16x32xf32>
      %c0_21 = arith.constant 0 : index
      %c0_22 = arith.constant 0 : index
      %31 = vector.load %arg6[%c0_21, %c0_22] : memref<1x32xf32, #tpu.memory_space<vmem>>, vector<1x32xf32>
      %32 = vector.broadcast %31 : vector<1x32xf32> to vector<16x32xf32>
      %33 = arith.addf %30, %32 : vector<16x32xf32>
      %c0_23 = arith.constant 0 : index
      %c0_24 = arith.constant 0 : index
      %34 = vector.load %arg7[%c0_23, %c0_24] : memref<16x32xf32, #tpu.memory_space<vmem>>, vector<16x32xf32>
      tpu.vector_store %arg7[%c0_23, %c0_24], %33 {strides = array<i32>} : memref<16x32xf32, #tpu.memory_space<vmem>>, vector<16x32xf32>,
    } else {
    }
    return
  }
  func.func @transform_0(%arg0: i32, %arg1: i32) -> (i32, i32) {
    %c0_i32 = arith.constant 0 : i32
    %c0_i32_0 = arith.constant 0 : i32
    return %arg0, %c0_i32 : i32, i32
  }
  func.func @transform_1(%arg0: i32, %arg1: i32) -> (i32, i32) {
    %c0_i32 = arith.constant 0 : i32
    %c0_i32_0 = arith.constant 0 : i32
    return %arg1, %c0_i32 : i32, i32
  }
  func.func @transform_2(%arg0: i32, %arg1: i32) -> (i32, i32) {
    %c0_i32 = arith.constant 0 : i32
    %c0_i32_0 = arith.constant 0 : i32
    return %c0_i32, %arg1 : i32, i32
  }
  func.func @transform_3(%arg0: i32, %arg1: i32) -> (i32, i32) {
    %c0_i32 = arith.constant 0 : i32
    %c0_i32_0 = arith.constant 0 : i32
    return %c0_i32, %arg1 : i32, i32
  }
  func.func @transform_4(%arg0: i32, %arg1: i32) -> (i32, i32) {
    %c0_i32 = arith.constant 0 : i32
    %c0_i32_0 = arith.constant 0 : i32
    %c0_i32_1 = arith.constant 0 : i32
    return %c0_i32, %c0_i32_0 : i32, i32
  }
  func.func @transform_5(%arg0: i32, %arg1: i32) -> (i32, i32) {
    %c0_i32 = arith.constant 0 : i32
    %c0_i32_0 = arith.constant 0 : i32
    return %arg0, %c0_i32 : i32, i32
  }
}

</mosaic_0001>

<llo_original>
// kernel: tpu_custom_call.1
$region0: #{tpu_custom_call.1}
  #allocation0 [shape = 'u32[]', space=smem, size = 0x4, offset = 0x4, fixed_abs, tag = 'smem constant byte address 0x4 - core index']
  #allocation1 [shape = 'u32[72,128]{1,0:T(1,128)}', space=vmem, size = 0x9000, scoped, tag = 'internal scratch']
  #allocation2 [shape = 'f32[16,32]{1,0:T(8,128)}', space=vmem, size = 0x2000, scoped, tag = 'scratch operand']
  %s0 = inlined_call_operand.vmem [shape: f32[16,32], index: 0, kind: input, shape index: {}]
  %s1 = inlined_call_operand.vmem [shape: f32[128,32], index: 1, kind: input, shape index: {}]
  %s2 = inlined_call_operand.vmem [shape: f32[1,128], index: 2, kind: input, shape index: {}]
  %s3 = inlined_call_operand.vmem [shape: f32[32,128], index: 3, kind: input, shape index: {}]
  %s4 = inlined_call_operand.vmem [shape: f32[1,32], index: 4, kind: input, shape index: {}]
  %s5 = inlined_call_operand.hbm [shape: f32[16,32], index: 5, kind: output, shape index: {}]
  %s6 = sld [smem:[#allocation0]]
  $region38: #{tpu_custom_call.1} parent=0
    _
  %s8 = ssub.s32 1, %s6
  %s9 = scalar_select 0, %s8, %s6
  $region1: #{tpu_custom_call.1} parent=0
    #allocation3 [shape = 'u8[8192]{0}', space=vmem, size = 0x2000, scoped, tag = 'output window, operand 0, single buffered']
    #allocation4 [shape = 's32[1]{0}', space=sflag, size = 0x4, scoped, tag = 'scoped memory for tpu_custom_call.1']
    %10 = vsyncpa [#allocation4], 0
    // Predicated region
    $region2: #{tpu_custom_call.1} parent=1 // pred_check
      _
    $region3: #{tpu_custom_call.1} parent=1 // pred_check_branch
      %12 = sbr.rel (0) target = $region5
    $region4: #{tpu_custom_call.1} parent=1 // pred_region
      _
    $region5: #{tpu_custom_call.1} parent=1 // pred_fallthru
      _
    // Predicated region
    $region6: #{tpu_custom_call.1} parent=1 // pred_check
      _
    $region7: #{tpu_custom_call.1} parent=1 // pred_check_branch
      %14 = sbr.rel (0) target = $region9
    $region8: #{tpu_custom_call.1} parent=1 // pred_region
      _
    $region9: #{tpu_custom_call.1} parent=1 // pred_fallthru
      _
    // Predicated region
    $region10: #{tpu_custom_call.1} parent=1 // pred_check
      _
    $region11: #{tpu_custom_call.1} parent=1 // pred_check_branch
      %16 = sbr.rel (0) target = $region13
    $region12: #{tpu_custom_call.1} parent=1 // pred_region
      _
    $region13: #{tpu_custom_call.1} parent=1 // pred_fallthru
      _
    // Predicated region
    $region14: #{tpu_custom_call.1} parent=1 // pred_check
      _
    $region15: #{tpu_custom_call.1} parent=1 // pred_check_branch
      %18 = sbr.rel (0) target = $region17
    $region16: #{tpu_custom_call.1} parent=1 // pred_region
      _
    $region17: #{tpu_custom_call.1} parent=1 // pred_fallthru
      _
    // Predicated region
    $region18: #{tpu_custom_call.1} parent=1 // pred_check
      _
    $region19: #{tpu_custom_call.1} parent=1 // pred_check_branch
      %20 = sbr.rel (0) target = $region21
    $region20: #{tpu_custom_call.1} parent=1 // pred_region
      _
    $region21: #{tpu_custom_call.1} parent=1 // pred_fallthru
      _
    %p21 = scmp.eq.s32.totalorder 0, 0
    // Predicated region
    $region22: #{tpu_custom_call.1} parent=1 // pred_check
      %p22 = pneg %p21
    $region23: #{tpu_custom_call.1} parent=1 // pred_check_branch
      %24 = sbr.rel (%p22) target = $region25
    $region24: #{tpu_custom_call.1} parent=1 // pred_region
      %vm25 = vcmask 261120
      %26 = vst.msk [vmem:[#allocation2] sm:$0xff] %vm25, 0.0
      %27 = vst.msk [vmem:[#allocation2 + $0x8] sm:$0xff] %vm25, 0.0
    $region25: #{tpu_custom_call.1} parent=1 // pred_fallthru
      _
    %v28 = vld [vmem:[%s0] sm:$0xff]
    %v29 = vld [vmem:[%s0 + $0x8] sm:$0xff]
    %v30 = vld [vmem:[%s1] sm:$0xff]
    %v31 = vld [vmem:[%s1 + $0x8] sm:$0xff]
    %v32 = vld [vmem:[%s1 + $0x10] sm:$0xff]
    %v33 = vld [vmem:[%s1 + $0x18] sm:$0xff]
    %v34 = vld [vmem:[%s1 + $0x20] sm:$0xff]
    %v35 = vld [vmem:[%s1 + $0x28] sm:$0xff]
    %v36 = vld [vmem:[%s1 + $0x30] sm:$0xff]
    %v37 = vld [vmem:[%s1 + $0x38] sm:$0xff]
    %v38 = vld [vmem:[%s1 + $0x40] sm:$0xff]
    %v39 = vld [vmem:[%s1 + $0x48] sm:$0xff]
    %v40 = vld [vmem:[%s1 + $0x50] sm:$0xff]
    %v41 = vld [vmem:[%s1 + $0x58] sm:$0xff]
    %v42 = vld [vmem:[%s1 + $0x60] sm:$0xff]
    %v43 = vld [vmem:[%s1 + $0x68] sm:$0xff]
    %v44 = vld [vmem:[%s1 + $0x70] sm:$0xff]
    %v45 = vld [vmem:[%s1 + $0x78] sm:$0xff]
    %v46 = vld [vmem:[%s2] sm:$0x1]
    %v48 = vperm.slane %v46, 0
    %vm50 = vcmask 261120
    %v52 = vsel %vm50, %v28, 0
    %v55 = vsel %vm50, %v29, 0
    %v58 = vsel %vm50, %v30, 0
    %v61 = vsel %vm50, %v31, 0
    %v64 = vsel %vm50, %v32, 0
    %v67 = vsel %vm50, %v33, 0
    %v70 = vsel %vm50, %v34, 0
    %v73 = vsel %vm50, %v35, 0
    %v76 = vsel %vm50, %v36, 0
    %v79 = vsel %vm50, %v37, 0
    %v82 = vsel %vm50, %v38, 0
    %v85 = vsel %vm50, %v39, 0
    %v88 = vsel %vm50, %v40, 0
    %v91 = vsel %vm50, %v41, 0
    %v94 = vsel %vm50, %v42, 0
    %v97 = vsel %vm50, %v43, 0
    %v100 = vsel %vm50, %v44, 0
    %v103 = vsel %vm50, %v45, 0
    %105 = vmatpush.xpose.msra.mxu0 %v103
    %106 = vmatpush.xpose.msra.mxu0 %v100
    %107 = vmatpush.xpose.msra.mxu0 %v97
    %108 = vmatpush.xpose.msra.mxu0 %v94
    %109 = vmatpush.xpose.msra.mxu0 %v91
    %110 = vmatpush.xpose.msra.mxu0 %v88
    %111 = vmatpush.xpose.msra.mxu0 %v85
    %112 = vmatpush.xpose.msra.mxu0 %v82
    %113 = vmatpush.xpose.msra.mxu0 %v79
    %114 = vmatpush.xpose.msra.mxu0 %v76
    %115 = vmatpush.xpose.msra.mxu0 %v73
    %116 = vmatpush.xpose.msra.mxu0 %v70
    %117 = vmatpush.xpose.msra.mxu0 %v67
    %118 = vmatpush.xpose.msra.mxu0 %v64
    %119 = vmatpush.xpose.msra.mxu0 %v61
    %120 = vmatpush.xpose.msra.mxu0 %v58
    %121 = vmatmul.f32.gmra.mxu0 %v52
    %v122 = vpop.f32.mrf.mxu0
    %v123 = vadd.f32 %v48, %v122
    %124 = vmatmul.f32.gmra.mxu0 %v55
    %v125 = vpop.f32.mrf.mxu0
    %v126 = vadd.f32 %v48, %v125
    %127 = vdwg.mxu0
    %v128 = vmul.f32 %v123, 0.5
    %v129 = vmul.f32 %v126, 0.5
    %v130 = vmul.f32 %v123, 0.044715
    %v131 = vmul.f32 %v126, 0.044715
    %v132 = vmul.f32 %v130, %v123
    %v133 = vmul.f32 %v131, %v126
    %v134 = vmul.f32 %v132, %v123
    %v135 = vmul.f32 %v133, %v126
    %v136 = vadd.f32 %v123, %v134
    %v137 = vadd.f32 %v126, %v135
    %v138 = vmul.f32 %v136, 0.7978846
    %v139 = vmul.f32 %v137, 0.7978846
    %v140 = vtanh.pop %v138
    %v141 = vtanh.pop %v139
    %v142 = vadd.f32 %v140, 1.0
    %v143 = vadd.f32 %v141, 1.0
    %v144 = vmul.f32 %v128, %v142
    %v145 = vmul.f32 %v129, %v143
    %v146 = vld [vmem:[#allocation2] sm:$0xff]
    %v147 = vld [vmem:[#allocation2 + $0x8] sm:$0xff]
    %v148 = vld [vmem:[%s3] sm:$0xff]
    %v149 = vld [vmem:[%s3 + $0x8] sm:$0xff]
    %v150 = vld [vmem:[%s3 + $0x10] sm:$0xff]
    %v151 = vld [vmem:[%s3 + $0x18] sm:$0xff]
    %152 = vmatpush.xpose.msra.mxu0 0.0
    %153 = vmatpush.xpose.msra.mxu0 0.0
    %154 = vmatpush.xpose.msra.mxu0 0.0
    %155 = vmatpush.xpose.msra.mxu0 0.0
    %156 = vmatpush.xpose.msra.mxu0 0.0
    %157 = vmatpush.xpose.msra.mxu0 0.0
    %158 = vmatpush.xpose.msra.mxu0 0.0
    %159 = vmatpush.xpose.msra.mxu0 0.0
    %160 = vmatpush.xpose.msra.mxu0 0.0
    %161 = vmatpush.xpose.msra.mxu0 0.0
    %162 = vmatpush.xpose.msra.mxu0 0.0
    %163 = vmatpush.xpose.msra.mxu0 0.0
    %164 = vmatpush.xpose.msra.mxu0 %v151
    %165 = vmatpush.xpose.msra.mxu0 %v150
    %166 = vmatpush.xpose.msra.mxu0 %v149
    %167 = vmatpush.xpose.msra.mxu0 %v148
    %168 = vmatmul.f32.gmra.mxu0 %v144
    %v169 = vpop.f32.mrf.mxu0
    %v170 = vadd.f32 0.0, %v169
    %171 = vmatmul.f32.gmra.mxu0 %v145
    %v172 = vpop.f32.mrf.mxu0
    %v173 = vadd.f32 0.0, %v172
    %174 = vdwg.mxu0
    %v175 = vadd.f32 %v146, %v170
    %v176 = vadd.f32 %v147, %v173
    %177 = vst.msk [vmem:[#allocation2] sm:$0xff] %vm50, %v175
    %178 = vst.msk [vmem:[#allocation2 + $0x8] sm:$0xff] %vm50, %v176
    // Predicated region
    $region26: #{tpu_custom_call.1} parent=1 // pred_check
      %p179 = pneg %p21
    $region27: #{tpu_custom_call.1} parent=1 // pred_check_branch
      %181 = sbr.rel (%p179) target = $region29
    $region28: #{tpu_custom_call.1} parent=1 // pred_region
      %v182 = vld [vmem:[#allocation2] sm:$0xff]
      %v183 = vld [vmem:[#allocation2 + $0x8] sm:$0xff]
      %v184 = vld [vmem:[%s4] sm:$0x1]
      %v186 = vperm.slane %v184, 0
      %v188 = vadd.f32 %v182, %v186
      %v189 = vadd.f32 %v183, %v186
      %190 = vst.msk [vmem:[#allocation3] sm:$0xff] %vm50, %v188
      %191 = vst.msk [vmem:[#allocation3 + $0x8] sm:$0xff] %vm50, %v189
    $region29: #{tpu_custom_call.1} parent=1 // pred_fallthru
      _
    // Predicated region
    $region30: #{tpu_custom_call.1} parent=1 // pred_check
      _
    $region31: #{tpu_custom_call.1} parent=1 // pred_check_branch
      %193 = sbr.rel (0) target = $region33
    $region32: #{tpu_custom_call.1} parent=1 // pred_region
      %195 = vsyncadd [#allocation4], 0
      %s196 = sshll.u32 [#allocation3], 4
      %s197 = int_to_ptr.vmem [resolvable:$true] %s196
      %s198 = sshll.u32 %s5, 4
      %s199 = int_to_ptr.hbm [resolvable:$true] %s198
      %204 = dma.vmem_to_hbm [thread:$0]  %s197, 256, %s199, [#allocation4], 128, 128, 8
    $region33: #{tpu_custom_call.1} parent=1 // pred_fallthru
      _
    // Predicated region
    $region34: #{tpu_custom_call.1} parent=1 // pred_check
      _
    $region35: #{tpu_custom_call.1} parent=1 // pred_check_branch
      %206 = sbr.rel (0) target = $region37
    $region36: #{tpu_custom_call.1} parent=1 // pred_region
      %208 = dma.done [#allocation4], 256
    $region37: #{tpu_custom_call.1} parent=1 // pred_fallthru
      _
    %209 = vsyncpa [#allocation4], 1

</llo_original>
